<compile_context>
chip_gen: v6e
topology: v6e:2x2x1
jax: 0.10.0
libtpu: 0.0.40
codegen_flags: <defaults>
</compile_context>

<pallas_src>
import jax
import jax.numpy as jnp
from jax.experimental import pallas as pl
from jax.experimental.pallas import tpu as pltpu


def _matmul_bias_kernel(x_ref, w_ref, b_ref, o_ref):
    # x_ref: (tm, K), w_ref: (K, N), b_ref: (1, N), o_ref: (tm, N)
    acc = jnp.dot(x_ref[...], w_ref[...], preferred_element_type=jnp.float32)
    o_ref[...] = (acc + b_ref[...].astype(jnp.float32)).astype(o_ref.dtype)


def patch_embed_matmul(patches, weight, bias, *, tm=512, out_dtype=None):
    """patches: (M, K) @ weight: (K, N) + bias: (N,) -> (M, N)."""
    M, K = patches.shape
    Kw, N = weight.shape
    assert Kw == K and bias.shape == (N,)
    out_dtype = jnp.dtype(patches.dtype if out_dtype is None else out_dtype)

    def _block_bytes(t):
        # Double-buffered x / out tiles; weight & bias resident (count 2x to be safe).
        return (2 * t * K * patches.dtype.itemsize
                + 2 * K * N * weight.dtype.itemsize
                + 2 * N * bias.dtype.itemsize
                + 2 * t * N * out_dtype.itemsize)

    if M <= tm:
        tm = M                       # full-dim block (allowed even if M % 8 != 0)
    else:
        tm = max(8, (tm // 8) * 8)   # keep sublane alignment for partial tiles
        budget = 40 * 1024 * 1024    # conservative: also fits v7x (64 MiB VMEM/TC)
        while tm > 8 and _block_bytes(tm) > budget:
            tm //= 2

    bias2d = bias.reshape(1, N)
    grid = (pl.cdiv(M, tm),)         # ragged last tile is masked by Pallas

    cost = pl.CostEstimate(
        flops=2 * M * K * N,
        transcendentals=0,
        bytes_accessed=(M * K * patches.dtype.itemsize
                        + K * N * weight.dtype.itemsize
                        + N * bias.dtype.itemsize
                        + M * N * out_dtype.itemsize),
    )

    return pl.pallas_call(
        _matmul_bias_kernel,
        out_shape=jax.ShapeDtypeStruct((M, N), out_dtype),
        grid_spec=pl.GridSpec(
            grid=grid,
            in_specs=[
                pl.BlockSpec((tm, K), lambda i: (i, 0)),
                pl.BlockSpec((K, N), lambda i: (0, 0)),   # resident weight
                pl.BlockSpec((1, N), lambda i: (0, 0)),   # resident bias
            ],
            out_specs=pl.BlockSpec((tm, N), lambda i: (i, 0)),  # lane-dense full-N store
        ),
        compiler_params=pltpu.CompilerParams(
            dimension_semantics=("parallel",),            # shard M over megacore TCs
            vmem_limit_bytes=48 * 1024 * 1024,            # > v5e/v6e scoped defaults, < v7x phys
            allow_input_fusion=[True, False, False],      # fold the rearrange into input DMA
        ),
        cost_estimate=cost,
    )(patches, weight, bias2d)


class PatchEmbed:
    """JAX/Pallas re-implementation of cosmos PatchEmbed."""

    def __init__(self, spatial_patch_size, temporal_patch_size,
                 in_channels=3, out_channels=768, bias=True,
                 compute_dtype=jnp.bfloat16, key=None):
        self.m = spatial_patch_size
        self.r = temporal_patch_size
        self.in_channels = in_channels
        self.out_channels = out_channels
        self.compute_dtype = compute_dtype
        K = in_channels * spatial_patch_size * spatial_patch_size * temporal_patch_size
        key = jax.random.PRNGKey(0) if key is None else key
        kw, kb = jax.random.split(key)
        # nn.Linear default init: U(-1/sqrt(K), 1/sqrt(K)); weight kept (in, out).
        bound = 1.0 / (K ** 0.5)
        self.weight = jax.random.uniform(kw, (K, out_channels), minval=-bound,
                                         maxval=bound, dtype=jnp.float32)
        if bias:
            self.bias = jax.random.uniform(kb, (out_channels,), minval=-bound,
                                           maxval=bound, dtype=jnp.float32)
        else:
            self.bias = jnp.zeros((out_channels,), jnp.float32)

    def __call__(self, x):
        # x: (B, C, T, H, W) -> (B, T//r, H//m, W//m, out_channels)
        assert x.ndim == 5
        B, C, T, H, W = x.shape
        r, m = self.r, self.m
        assert T % r == 0 and H % m == 0 and W % m == 0
        t, h, w = T // r, H // m, W // m
        out_dtype = x.dtype
        # Rearrange 'b c (t r) (h m) (w n) -> b t h w (c r m n)'; cast to the
        # bf16 compute dtype first so the shuffle moves half the bytes.
        xr = x.astype(self.compute_dtype).reshape(B, C, t, r, h, m, w, m)
        xr = jnp.transpose(xr, (0, 2, 4, 6, 1, 3, 5, 7))   # b t h w c r m n
        K = C * r * m * m
        patches = xr.reshape(B * t * h * w, K)
        out = patch_embed_matmul(patches,
                                 self.weight.astype(self.compute_dtype),
                                 self.bias, out_dtype=out_dtype)
        return out.reshape(B, t, h, w, self.out_channels)


def _reference(x, weight, bias, r, m, compute_dtype):
    # Same bf16 input quantization as the kernel, f32 accumulation.
    B, C, T, H, W = x.shape
    t, h, w = T // r, H // m, W // m
    xr = x.astype(compute_dtype).astype(jnp.float32)
    xr = xr.reshape(B, C, t, r, h, m, w, m)
    xr = jnp.transpose(xr, (0, 2, 4, 6, 1, 3, 5, 7)).reshape(B, t, h, w, -1)
    wf = weight.astype(compute_dtype).astype(jnp.float32)
    return xr @ wf + bias


if __name__ == "__main__":
    # B=2, C=4, T=4, H=16, W=16, spatial_patch=2, temporal_patch=2, out=128
    # -> K = 4*2*2*2 = 32, M = 2*2*8*8 = 256, N = 128
    B, C, T, H, W = 2, 4, 4, 16, 16
    sp, tp, out_ch = 2, 2, 128

    key = jax.random.PRNGKey(0)
    kx, kp, k1, k2, k3 = jax.random.split(key, 5)
    x = jax.random.normal(kx, (B, C, T, H, W), dtype=jnp.float32)

    mod = PatchEmbed(sp, tp, in_channels=C, out_channels=out_ch, key=kp)
    y = jax.block_until_ready(mod(x))
    assert y.shape == (B, T // tp, H // sp, W // sp, out_ch), y.shape
    assert y.dtype == x.dtype

    y_ref = _reference(x, mod.weight, mod.bias, tp, sp, mod.compute_dtype)
    assert jnp.allclose(y, y_ref, rtol=1e-2, atol=1e-2), "mismatch vs reference"

    # Ragged-M path: M not a multiple of the tile; Pallas masks the last tile.
    Mr, Kr, Nr = 200, 32, 128
    pr = (jax.random.normal(k1, (Mr, Kr), jnp.float32) * 0.5).astype(jnp.bfloat16)
    wr = (jax.random.normal(k2, (Kr, Nr), jnp.float32) * 0.1).astype(jnp.bfloat16)
    br = jax.random.normal(k3, (Nr,), jnp.float32) * 0.1
    yr = jax.block_until_ready(
        patch_embed_matmul(pr, wr, br, tm=64, out_dtype=jnp.float32))
    yr_ref = pr.astype(jnp.float32) @ wr.astype(jnp.float32) + br
    assert jnp.allclose(yr, yr_ref, rtol=1e-2, atol=1e-2), "ragged-M mismatch"

    print("KERNEL_OK")
</pallas_src>

<mosaic_0001>
module attributes {stable_mosaic.version = 11 : i64} {
  func.func @_matmul_bias_kernel(%arg0: i32, %arg1: memref<256x32xbf16, #tpu.memory_space<vmem>>, %arg2: memref<32x128xbf16, #tpu.memory_space<vmem>>, %arg3: memref<1x128xf32, #tpu.memory_space<vmem>>, %arg4: memref<256x128xf32, #tpu.memory_space<vmem>>) attributes {dimension_semantics = [#tpu.dimension_semantics<parallel>], iteration_bounds = array<i64: 1>, scalar_prefetch = 0 : i64, scratch_operands = 0 : i64, tpu.core_type = #tpu.core_type<tc>, window_params = [{transform_indices = @transform_0, window_bounds = array<i64: 256, 32>}, {pipeline_mode = #tpu.pipeline_mode<synchronous>, transform_indices = @transform_1, window_bounds = array<i64: 32, 128>}, {pipeline_mode = #tpu.pipeline_mode<synchronous>, transform_indices = @transform_2, window_bounds = array<i64: 1, 128>}, {transform_indices = @transform_3, window_bounds = array<i64: 256, 128>}]} {
    %c0 = arith.constant 0 : index
    %c0_0 = arith.constant 0 : index
    %0 = vector.load %arg1[%c0, %c0_0] : memref<256x32xbf16, #tpu.memory_space<vmem>>, vector<256x32xbf16>
    %c0_1 = arith.constant 0 : index
    %c0_2 = arith.constant 0 : index
    %1 = vector.load %arg2[%c0_1, %c0_2] : memref<32x128xbf16, #tpu.memory_space<vmem>>, vector<32x128xbf16>
    %cst = arith.constant dense<0.000000e+00> : vector<256x128xf32>
    %2 = tpu.matmul %0, %1, %cst {dimension_numbers = #tpu.dot_dimension_numbers<[1], [0], [0], [1], [0, 0, 1, 1], [], []>} : vector<256x32xbf16>, vector<32x128xbf16>, vector<256x128xf32> -> vector<256x128xf32>
    %c0_3 = arith.constant 0 : index
    %c0_4 = arith.constant 0 : index
    %3 = vector.load %arg3[%c0_3, %c0_4] : memref<1x128xf32, #tpu.memory_space<vmem>>, vector<1x128xf32>
    %4 = vector.broadcast %3 : vector<1x128xf32> to vector<256x128xf32>
    %5 = arith.addf %2, %4 : vector<256x128xf32>
    %c0_5 = arith.constant 0 : index
    %c0_6 = arith.constant 0 : index
    %6 = vector.load %arg4[%c0_5, %c0_6] : memref<256x128xf32, #tpu.memory_space<vmem>>, vector<256x128xf32>
    tpu.vector_store %arg4[%c0_5, %c0_6], %5 {strides = array<i32>} : memref<256x128xf32, #tpu.memory_space<vmem>>, vector<256x128xf32>,
    return
  }
  func.func @transform_0(%arg0: i32) -> (i32, i32) {
    %c0_i32 = arith.constant 0 : i32
    %c0_i32_0 = arith.constant 0 : i32
    return %arg0, %c0_i32 : i32, i32
  }
  func.func @transform_1(%arg0: i32) -> (i32, i32) {
    %c0_i32 = arith.constant 0 : i32
    %c0_i32_0 = arith.constant 0 : i32
    %c0_i32_1 = arith.constant 0 : i32
    return %c0_i32, %c0_i32_0 : i32, i32
  }
  func.func @transform_2(%arg0: i32) -> (i32, i32) {
    %c0_i32 = arith.constant 0 : i32
    %c0_i32_0 = arith.constant 0 : i32
    %c0_i32_1 = arith.constant 0 : i32
    return %c0_i32, %c0_i32_0 : i32, i32
  }
  func.func @transform_3(%arg0: i32) -> (i32, i32) {
    %c0_i32 = arith.constant 0 : i32
    %c0_i32_0 = arith.constant 0 : i32
    return %arg0, %c0_i32 : i32, i32
  }
}

</mosaic_0001>

<llo_original>
// kernel: tpu_custom_call.1
$region0: #{tpu_custom_call.1}
  #allocation0 [shape = 'u32[]', space=smem, size = 0x4, offset = 0x4, fixed_abs, tag = 'smem constant byte address 0x4 - core index']
  #allocation1 [shape = 'u32[144,128]{1,0:T(1,128)}', space=vmem, size = 0x12000, scoped, tag = 'internal scratch']
  %s0 = inlined_call_operand.vmem [shape: bf16[256,32], index: 0, kind: input, shape index: {}]
  %s1 = inlined_call_operand.vmem [shape: bf16[32,128], index: 1, kind: input, shape index: {}]
  %s2 = inlined_call_operand.vmem [shape: f32[1,128], index: 2, kind: input, shape index: {}]
  %s3 = inlined_call_operand.hbm [shape: f32[256,128], index: 3, kind: output, shape index: {}]
  %s4 = sld [smem:[#allocation0]]
  $region22: #{tpu_custom_call.1} parent=0
    _
  %s6 = ssub.s32 1, %s4
  %s7 = scalar_select 0, %s6, %s4
  $region1: #{tpu_custom_call.1} parent=0
    #allocation2 [shape = 'u8[131072]{0}', space=vmem, size = 0x20000, scoped, tag = 'output window, operand 0, single buffered']
    #allocation3 [shape = 's32[1]{0}', space=sflag, size = 0x4, scoped, tag = 'scoped memory for tpu_custom_call.1']
    %8 = vsyncpa [#allocation3], 0
    // Predicated region
    $region2: #{tpu_custom_call.1} parent=1 // pred_check
      _
    $region3: #{tpu_custom_call.1} parent=1 // pred_check_branch
      %10 = sbr.rel (0) target = $region5
    $region4: #{tpu_custom_call.1} parent=1 // pred_region
      _
    $region5: #{tpu_custom_call.1} parent=1 // pred_fallthru
      _
    // Predicated region
    $region6: #{tpu_custom_call.1} parent=1 // pred_check
      _
    $region7: #{tpu_custom_call.1} parent=1 // pred_check_branch
      %12 = sbr.rel (0) target = $region9
    $region8: #{tpu_custom_call.1} parent=1 // pred_region
      _
    $region9: #{tpu_custom_call.1} parent=1 // pred_fallthru
      _
    // Predicated region
    $region10: #{tpu_custom_call.1} parent=1 // pred_check
      _
    $region11: #{tpu_custom_call.1} parent=1 // pred_check_branch
      %14 = sbr.rel (0) target = $region13
    $region12: #{tpu_custom_call.1} parent=1 // pred_region
      _
    $region13: #{tpu_custom_call.1} parent=1 // pred_fallthru
      _
    %v16 = vld [vmem:[%s0] sm:$0xf]
    %v17 = vld [vmem:[%s0 + $0x4] sm:$0xf]
    %v18 = vld [vmem:[%s0 + $0x8] sm:$0xf]
    %v19 = vld [vmem:[%s0 + $0xc] sm:$0xf]
    %v20 = vld [vmem:[%s0 + $0x10] sm:$0xf]
    %v21 = vld [vmem:[%s0 + $0x14] sm:$0xf]
    %v22 = vld [vmem:[%s0 + $0x18] sm:$0xf]
    %v23 = vld [vmem:[%s0 + $0x1c] sm:$0xf]
    %v24 = vld [vmem:[%s0 + $0x20] sm:$0xf]
    %v25 = vld [vmem:[%s0 + $0x24] sm:$0xf]
    %v26 = vld [vmem:[%s0 + $0x28] sm:$0xf]
    %v27 = vld [vmem:[%s0 + $0x2c] sm:$0xf]
    %v28 = vld [vmem:[%s0 + $0x30] sm:$0xf]
    %v29 = vld [vmem:[%s0 + $0x34] sm:$0xf]
    %v30 = vld [vmem:[%s0 + $0x38] sm:$0xf]
    %v31 = vld [vmem:[%s0 + $0x3c] sm:$0xf]
    %v32 = vld [vmem:[%s0 + $0x40] sm:$0xf]
    %v33 = vld [vmem:[%s0 + $0x44] sm:$0xf]
    %v34 = vld [vmem:[%s0 + $0x48] sm:$0xf]
    %v35 = vld [vmem:[%s0 + $0x4c] sm:$0xf]
    %v36 = vld [vmem:[%s0 + $0x50] sm:$0xf]
    %v37 = vld [vmem:[%s0 + $0x54] sm:$0xf]
    %v38 = vld [vmem:[%s0 + $0x58] sm:$0xf]
    %v39 = vld [vmem:[%s0 + $0x5c] sm:$0xf]
    %v40 = vld [vmem:[%s0 + $0x60] sm:$0xf]
    %v41 = vld [vmem:[%s0 + $0x64] sm:$0xf]
    %v42 = vld [vmem:[%s0 + $0x68] sm:$0xf]
    %v43 = vld [vmem:[%s0 + $0x6c] sm:$0xf]
    %v44 = vld [vmem:[%s0 + $0x70] sm:$0xf]
    %v45 = vld [vmem:[%s0 + $0x74] sm:$0xf]
    %v46 = vld [vmem:[%s0 + $0x78] sm:$0xf]
    %v47 = vld [vmem:[%s0 + $0x7c] sm:$0xf]
    %v48 = vld [vmem:[%s1] sm:$0xf]
    %v49 = vld [vmem:[%s1 + $0x4] sm:$0xf]
    %v50 = vld [vmem:[%s1 + $0x8] sm:$0xf]
    %v51 = vld [vmem:[%s1 + $0xc] sm:$0xf]
    %v52 = vld [vmem:[%s2] sm:$0x1]
    %v54 = vlaneseq
    %v55 = vshrl.u32 %v54, 7
    %v56 = vsub.s32 0, %v55
    %v57 = vrot.slane %v52, %v56
    %v91 = vunpack.c.l.b16 %v16
    %v92 = vunpack.c.l.b16 %v17
    %v93 = vunpack.c.l.b16 %v18
    %v94 = vunpack.c.l.b16 %v19
    %v95 = vunpack.c.l.b16 %v20
    %v96 = vunpack.c.l.b16 %v21
    %v97 = vunpack.c.l.b16 %v22
    %v98 = vunpack.c.l.b16 %v23
    %v99 = vunpack.c.l.b16 %v24
    %v100 = vunpack.c.l.b16 %v25
    %v101 = vunpack.c.l.b16 %v26
    %v102 = vunpack.c.l.b16 %v27
    %v103 = vunpack.c.l.b16 %v28
    %v104 = vunpack.c.l.b16 %v29
    %v105 = vunpack.c.l.b16 %v30
    %v106 = vunpack.c.l.b16 %v31
    %v107 = vunpack.c.l.b16 %v32
    %v108 = vunpack.c.l.b16 %v33
    %v109 = vunpack.c.l.b16 %v34
    %v110 = vunpack.c.l.b16 %v35
    %v111 = vunpack.c.l.b16 %v36
    %v112 = vunpack.c.l.b16 %v37
    %v113 = vunpack.c.l.b16 %v38
    %v114 = vunpack.c.l.b16 %v39
    %v115 = vunpack.c.l.b16 %v40
    %v116 = vunpack.c.l.b16 %v41
    %v117 = vunpack.c.l.b16 %v42
    %v118 = vunpack.c.l.b16 %v43
    %v119 = vunpack.c.l.b16 %v44
    %v120 = vunpack.c.l.b16 %v45
    %v121 = vunpack.c.l.b16 %v46
    %v122 = vunpack.c.l.b16 %v47
    %v123 = vpack.c.b16 %v92, %v91
    %v124 = vpack.c.b16 %v94, %v93
    %v125 = vpack.c.b16 %v96, %v95
    %v126 = vpack.c.b16 %v98, %v97
    %v127 = vpack.c.b16 %v100, %v99
    %v128 = vpack.c.b16 %v102, %v101
    %v129 = vpack.c.b16 %v104, %v103
    %v130 = vpack.c.b16 %v106, %v105
    %v131 = vpack.c.b16 %v108, %v107
    %v132 = vpack.c.b16 %v110, %v109
    %v133 = vpack.c.b16 %v112, %v111
    %v134 = vpack.c.b16 %v114, %v113
    %v135 = vpack.c.b16 %v116, %v115
    %v136 = vpack.c.b16 %v118, %v117
    %v137 = vpack.c.b16 %v120, %v119
    %v138 = vpack.c.b16 %v122, %v121
    %v143 = vunpack.c.l.b16 %v48
    %v144 = vunpack.c.l.b16 %v49
    %v145 = vunpack.c.l.b16 %v50
    %v146 = vunpack.c.l.b16 %v51
    %v147 = vpack.c.b16 %v144, %v143
    %v148 = vpack.c.b16 %v146, %v145
    %vm151 = vcmask 261120
    %v153 = vsel %vm151, %v123, 0
    %v156 = vsel %vm151, %v124, 0
    %v159 = vsel %vm151, %v125, 0
    %v162 = vsel %vm151, %v126, 0
    %v165 = vsel %vm151, %v127, 0
    %v168 = vsel %vm151, %v128, 0
    %v171 = vsel %vm151, %v129, 0
    %v174 = vsel %vm151, %v130, 0
    %v177 = vsel %vm151, %v131, 0
    %v180 = vsel %vm151, %v132, 0
    %v183 = vsel %vm151, %v133, 0
    %v186 = vsel %vm151, %v134, 0
    %v189 = vsel %vm151, %v135, 0
    %v192 = vsel %vm151, %v136, 0
    %v195 = vsel %vm151, %v137, 0
    %v198 = vsel %vm151, %v138, 0
    %200 = vmatprep.subr.bf16.mxu0 0
    %201 = vmatpush1.bf16.msra.mxu0 0
    %202 = vmatprep.subr.bf16.mxu0 0
    %203 = vmatpush1.bf16.msra.mxu0 0
    %204 = vmatprep.subr.bf16.mxu0 0
    %205 = vmatpush1.bf16.msra.mxu0 0
    %206 = vmatprep.subr.bf16.mxu0 0
    %207 = vmatpush1.bf16.msra.mxu0 0
    %208 = vmatprep.subr.bf16.mxu0 0
    %209 = vmatpush1.bf16.msra.mxu0 0
    %210 = vmatprep.subr.bf16.mxu0 0
    %211 = vmatpush1.bf16.msra.mxu0 0
    %212 = vmatprep.subr.bf16.mxu0 0
    %213 = vmatpush1.bf16.msra.mxu0 %v148
    %214 = vmatprep.subr.bf16.mxu0 0
    %215 = vmatpush1.bf16.msra.mxu0 %v147
    %216 = vmatprep.subr.bf16.mxu0 0
    %217 = vmatpush2.bf16.msra.mxu0 0
    %218 = vmatprep.subr.bf16.mxu0 0
    %219 = vmatpush2.bf16.msra.mxu0 0
    %220 = vmatprep.subr.bf16.mxu0 0
    %221 = vmatpush2.bf16.msra.mxu0 0
    %222 = vmatprep.subr.bf16.mxu0 0
    %223 = vmatpush2.bf16.msra.mxu0 0
    %224 = vmatprep.subr.bf16.mxu0 0
    %225 = vmatpush2.bf16.msra.mxu0 0
    %226 = vmatprep.subr.bf16.mxu0 0
    %227 = vmatpush2.bf16.msra.mxu0 0
    %228 = vmatprep.subr.bf16.mxu0 0
    %229 = vmatpush2.bf16.msra.mxu0 0
    %230 = vmatprep.subr.bf16.mxu0 0
    %231 = vmatpush2.bf16.msra.mxu0 0
    %232 = vmatprep.mubr.bf16.mxu0 0
    %233 = vmatmul.mubr.bf16.gmra.mxu0 %v153
    %v234 = vpop.f32.mrf.mxu0
    %v235 = vadd.f32 %v57, %v234
    %v236 = vpop.f32.mrf.mxu0
    %v237 = vpop.f32.mrf.mxu0
    %v238 = vadd.f32 %v57, %v237
    %v239 = vpop.f32.mrf.mxu0
    %240 = vmatprep.mubr.bf16.mxu0 0
    %241 = vmatmul.mubr.bf16.gmra.mxu0 %v156
    %v242 = vpop.f32.mrf.mxu0
    %v243 = vadd.f32 %v57, %v242
    %v244 = vpop.f32.mrf.mxu0
    %v245 = vpop.f32.mrf.mxu0
    %v246 = vadd.f32 %v57, %v245
    %v247 = vpop.f32.mrf.mxu0
    %248 = vmatprep.mubr.bf16.mxu0 0
    %249 = vmatmul.mubr.bf16.gmra.mxu0 %v159
    %v250 = vpop.f32.mrf.mxu0
    %v251 = vadd.f32 %v57, %v250
    %v252 = vpop.f32.mrf.mxu0
    %v253 = vpop.f32.mrf.mxu0
    %v254 = vadd.f32 %v57, %v253
    %v255 = vpop.f32.mrf.mxu0
    %256 = vmatprep.mubr.bf16.mxu0 0
    %257 = vmatmul.mubr.bf16.gmra.mxu0 %v162
    %v258 = vpop.f32.mrf.mxu0
    %v259 = vadd.f32 %v57, %v258
    %v260 = vpop.f32.mrf.mxu0
    %v261 = vpop.f32.mrf.mxu0
    %v262 = vadd.f32 %v57, %v261
    %v263 = vpop.f32.mrf.mxu0
    %264 = vmatprep.mubr.bf16.mxu0 0
    %265 = vmatmul.mubr.bf16.gmra.mxu0 %v165
    %v266 = vpop.f32.mrf.mxu0
    %v267 = vadd.f32 %v57, %v266
    %v268 = vpop.f32.mrf.mxu0
    %v269 = vpop.f32.mrf.mxu0
    %v270 = vadd.f32 %v57, %v269
    %v271 = vpop.f32.mrf.mxu0
    %272 = vmatprep.mubr.bf16.mxu0 0
    %273 = vmatmul.mubr.bf16.gmra.mxu0 %v168
    %v274 = vpop.f32.mrf.mxu0
    %v275 = vadd.f32 %v57, %v274
    %v276 = vpop.f32.mrf.mxu0
    %v277 = vpop.f32.mrf.mxu0
    %v278 = vadd.f32 %v57, %v277
    %v279 = vpop.f32.mrf.mxu0
    %280 = vmatprep.mubr.bf16.mxu0 0
    %281 = vmatmul.mubr.bf16.gmra.mxu0 %v171
    %v282 = vpop.f32.mrf.mxu0
    %v283 = vadd.f32 %v57, %v282
    %v284 = vpop.f32.mrf.mxu0
    %v285 = vpop.f32.mrf.mxu0
    %v286 = vadd.f32 %v57, %v285
    %v287 = vpop.f32.mrf.mxu0
    %288 = vmatprep.mubr.bf16.mxu0 0
    %289 = vmatmul.mubr.bf16.gmra.mxu0 %v174
    %v290 = vpop.f32.mrf.mxu0
    %v291 = vadd.f32 %v57, %v290
    %v292 = vpop.f32.mrf.mxu0
    %v293 = vpop.f32.mrf.mxu0
    %v294 = vadd.f32 %v57, %v293
    %v295 = vpop.f32.mrf.mxu0
    %296 = vmatprep.mubr.bf16.mxu0 0
    %297 = vmatmul.mubr.bf16.gmra.mxu0 %v177
    %v298 = vpop.f32.mrf.mxu0
    %v299 = vadd.f32 %v57, %v298
    %v300 = vpop.f32.mrf.mxu0
    %v301 = vpop.f32.mrf.mxu0
    %v302 = vadd.f32 %v57, %v301
    %v303 = vpop.f32.mrf.mxu0
    %304 = vmatprep.mubr.bf16.mxu0 0
    %305 = vmatmul.mubr.bf16.gmra.mxu0 %v180
    %v306 = vpop.f32.mrf.mxu0
    %v307 = vadd.f32 %v57, %v306
    %v308 = vpop.f32.mrf.mxu0
    %v309 = vpop.f32.mrf.mxu0
    %v310 = vadd.f32 %v57, %v309
    %v311 = vpop.f32.mrf.mxu0
    %312 = vmatprep.mubr.bf16.mxu0 0
    %313 = vmatmul.mubr.bf16.gmra.mxu0 %v183
    %v314 = vpop.f32.mrf.mxu0
    %v315 = vadd.f32 %v57, %v314
    %v316 = vpop.f32.mrf.mxu0
    %v317 = vpop.f32.mrf.mxu0
    %v318 = vadd.f32 %v57, %v317
    %v319 = vpop.f32.mrf.mxu0
    %320 = vmatprep.mubr.bf16.mxu0 0
    %321 = vmatmul.mubr.bf16.gmra.mxu0 %v186
    %v322 = vpop.f32.mrf.mxu0
    %v323 = vadd.f32 %v57, %v322
    %v324 = vpop.f32.mrf.mxu0
    %v325 = vpop.f32.mrf.mxu0
    %v326 = vadd.f32 %v57, %v325
    %v327 = vpop.f32.mrf.mxu0
    %328 = vmatprep.mubr.bf16.mxu0 0
    %329 = vmatmul.mubr.bf16.gmra.mxu0 %v189
    %v330 = vpop.f32.mrf.mxu0
    %v331 = vadd.f32 %v57, %v330
    %v332 = vpop.f32.mrf.mxu0
    %v333 = vpop.f32.mrf.mxu0
    %v334 = vadd.f32 %v57, %v333
    %v335 = vpop.f32.mrf.mxu0
    %336 = vmatprep.mubr.bf16.mxu0 0
    %337 = vmatmul.mubr.bf16.gmra.mxu0 %v192
    %v338 = vpop.f32.mrf.mxu0
    %v339 = vadd.f32 %v57, %v338
    %v340 = vpop.f32.mrf.mxu0
    %v341 = vpop.f32.mrf.mxu0
    %v342 = vadd.f32 %v57, %v341
    %v343 = vpop.f32.mrf.mxu0
    %344 = vmatprep.mubr.bf16.mxu0 0
    %345 = vmatmul.mubr.bf16.gmra.mxu0 %v195
    %v346 = vpop.f32.mrf.mxu0
    %v347 = vadd.f32 %v57, %v346
    %v348 = vpop.f32.mrf.mxu0
    %v349 = vpop.f32.mrf.mxu0
    %v350 = vadd.f32 %v57, %v349
    %v351 = vpop.f32.mrf.mxu0
    %352 = vmatprep.mubr.bf16.mxu0 0
    %353 = vmatmul.mubr.bf16.gmra.mxu0 %v198
    %v354 = vpop.f32.mrf.mxu0
    %v355 = vadd.f32 %v57, %v354
    %v356 = vpop.f32.mrf.mxu0
    %v357 = vpop.f32.mrf.mxu0
    %v358 = vadd.f32 %v57, %v357
    %v359 = vpop.f32.mrf.mxu0
    %360 = vdwg.mxu0
    %361 = vst [vmem:[#allocation2] sm:$0xff] %v235
    %362 = vst [vmem:[#allocation2 + $0x8] sm:$0xff] %v238
    %363 = vst [vmem:[#allocation2 + $0x10] sm:$0xff] %v243
    %364 = vst [vmem:[#allocation2 + $0x18] sm:$0xff] %v246
    %365 = vst [vmem:[#allocation2 + $0x20] sm:$0xff] %v251
    %366 = vst [vmem:[#allocation2 + $0x28] sm:$0xff] %v254
    %367 = vst [vmem:[#allocation2 + $0x30] sm:$0xff] %v259
    %368 = vst [vmem:[#allocation2 + $0x38] sm:$0xff] %v262
    %369 = vst [vmem:[#allocation2 + $0x40] sm:$0xff] %v267
    %370 = vst [vmem:[#allocation2 + $0x48] sm:$0xff] %v270
    %371 = vst [vmem:[#allocation2 + $0x50] sm:$0xff] %v275
    %372 = vst [vmem:[#allocation2 + $0x58] sm:$0xff] %v278
    %373 = vst [vmem:[#allocation2 + $0x60] sm:$0xff] %v283
    %374 = vst [vmem:[#allocation2 + $0x68] sm:$0xff] %v286
    %375 = vst [vmem:[#allocation2 + $0x70] sm:$0xff] %v291
    %376 = vst [vmem:[#allocation2 + $0x78] sm:$0xff] %v294
    %377 = vst [vmem:[#allocation2 + $0x80] sm:$0xff] %v299
    %378 = vst [vmem:[#allocation2 + $0x88] sm:$0xff] %v302
    %379 = vst [vmem:[#allocation2 + $0x90] sm:$0xff] %v307
    %380 = vst [vmem:[#allocation2 + $0x98] sm:$0xff] %v310
    %381 = vst [vmem:[#allocation2 + $0xa0] sm:$0xff] %v315
    %382 = vst [vmem:[#allocation2 + $0xa8] sm:$0xff] %v318
    %383 = vst [vmem:[#allocation2 + $0xb0] sm:$0xff] %v323
    %384 = vst [vmem:[#allocation2 + $0xb8] sm:$0xff] %v326
    %385 = vst [vmem:[#allocation2 + $0xc0] sm:$0xff] %v331
    %386 = vst [vmem:[#allocation2 + $0xc8] sm:$0xff] %v334
    %387 = vst [vmem:[#allocation2 + $0xd0] sm:$0xff] %v339
    %388 = vst [vmem:[#allocation2 + $0xd8] sm:$0xff] %v342
    %389 = vst [vmem:[#allocation2 + $0xe0] sm:$0xff] %v347
    %390 = vst [vmem:[#allocation2 + $0xe8] sm:$0xff] %v350
    %391 = vst [vmem:[#allocation2 + $0xf0] sm:$0xff] %v355
    %392 = vst [vmem:[#allocation2 + $0xf8] sm:$0xff] %v358
    // Predicated region
    $region14: #{tpu_custom_call.1} parent=1 // pred_check
      _
    $region15: #{tpu_custom_call.1} parent=1 // pred_check_branch
      %394 = sbr.rel (0) target = $region17
    $region16: #{tpu_custom_call.1} parent=1 // pred_region
      %s396 = ssub.s32 4096, 4096
      %397 = vsyncadd [#allocation3], %s396
      %s398 = sshll.u32 [#allocation2], 4
      %s399 = int_to_ptr.vmem [resolvable:$true] %s398
      %404 = dma.vmem_to_hbm [thread:$0]  %s399, 4096, %s3, [#allocation3], 128, 128, 8
    $region17: #{tpu_custom_call.1} parent=1 // pred_fallthru
      _
    // Predicated region
    $region18: #{tpu_custom_call.1} parent=1 // pred_check
      _
    $region19: #{tpu_custom_call.1} parent=1 // pred_check_branch
      %406 = sbr.rel (0) target = $region21
    $region20: #{tpu_custom_call.1} parent=1 // pred_region
      %407 = dma.done [#allocation3], 4096
    $region21: #{tpu_custom_call.1} parent=1 // pred_fallthru
      _
    %408 = vsyncpa [#allocation3], 1

</llo_original>
